<compile_context>
chip_gen: v7x
topology: tpu7x:2x2x1
jax: 0.10.0
libtpu: 0.0.40
codegen_flags: <defaults>
</compile_context>

<pallas_src>
import math

import jax
import jax.numpy as jnp
from jax.experimental import pallas as pl
from jax.experimental.pallas import tpu as pltpu


def _round_up(x: int, m: int) -> int:
    return (x + m - 1) // m * m


def _linear_relu_kernel(x_ref, w_ref, b_ref, o_ref, acc_ref):
    """One (tm, tn) output tile; K is the innermost ('arbitrary') grid axis.

    x_ref:   (tm, tk) bf16   activations
    w_ref:   (tn, tk) bf16   weight in (out, in) layout (no transpose needed)
    b_ref:   (1,  tn) f32    bias
    o_ref:   (tm, tn) f32    output
    acc_ref: (tm, tn) f32    VMEM accumulator, persists across the K axis
    """
    k = pl.program_id(2)

    @pl.when(k == 0)
    def _():
        acc_ref[...] = jnp.zeros_like(acc_ref)

    # MXU matmul contracting the last dim of both operands: (tm,tk) x (tn,tk)^T
    acc_ref[...] += jax.lax.dot_general(
        x_ref[...], w_ref[...],
        dimension_numbers=(((1,), (1,)), ((), ())),
        preferred_element_type=jnp.float32,
    )

    # Epilogue runs once per output tile: bias add + ReLU in f32, dense store.
    @pl.when(k == pl.num_programs(2) - 1)
    def _():
        o_ref[...] = jnp.maximum(acc_ref[...] + b_ref[...], 0.0).astype(o_ref.dtype)


# Tile sizes (sublane/lane/MXU friendly; a few hundred KiB of VMEM per step so
# the plan comfortably fits v7x's 64 MiB VMEM with double-buffering headroom).
_TM = 8        # batch tile  (multiple of 8 sublanes; tiny demo batch)
_TN = 128      # output tile (multiple of 128 lanes -> unmasked vst)
_TK = 512      # reduction tile


def prepare_params(weight, bias, *, tn=_TN, tk=_TK):
    """One-time parameter prep (do at init time, not per forward call).

    weight: (O, F) f32 (PyTorch nn.Linear layout) -> (Op, Fp) bf16, zero-padded
    bias:   (O,)   f32                            -> (1, Op)  f32,  zero-padded
    """
    o, f = weight.shape
    op, fp = _round_up(o, tn), _round_up(f, tk)
    w_p = jnp.zeros((op, fp), jnp.bfloat16).at[:o, :f].set(weight.astype(jnp.bfloat16))
    b_p = jnp.zeros((1, op), jnp.float32).at[0, :o].set(bias.astype(jnp.float32))
    return w_p, b_p


def output_layer_forward(x, w_padded, b_padded, output_class):
    """Equivalent of OutputLayer.forward: ReLU(flatten(x, 1) @ W.T + b).

    x: (B, C, H, W) float32; returns (B, output_class) float32.
    """
    b = x.shape[0]
    f = math.prod(x.shape[1:])
    op, fp = w_padded.shape
    bp = _round_up(b, _TM)

    # flatten(x, 1), cast to bf16, zero-pad to tile-aligned (Bp, Fp)
    x2d = x.reshape(b, f).astype(jnp.bfloat16)
    x2d = jnp.zeros((bp, fp), jnp.bfloat16).at[:b, :f].set(x2d)

    grid = (bp // _TM, op // _TN, fp // _TK)

    out_padded = pl.pallas_call(
        _linear_relu_kernel,
        out_shape=jax.ShapeDtypeStruct((bp, op), jnp.float32),
        grid_spec=pltpu.PrefetchScalarGridSpec(
            num_scalar_prefetch=0,
            grid=grid,
            in_specs=[
                pl.BlockSpec((_TM, _TK), lambda i, j, k: (i, k)),   # activations
                pl.BlockSpec((_TN, _TK), lambda i, j, k: (j, k)),   # weight (O, F)
                pl.BlockSpec((1, _TN), lambda i, j, k: (0, j)),     # bias
            ],
            out_specs=pl.BlockSpec((_TM, _TN), lambda i, j, k: (i, j)),
            scratch_shapes=[pltpu.VMEM((_TM, _TN), jnp.float32)],
        ),
        compiler_params=pltpu.CompilerParams(
            dimension_semantics=("parallel", "parallel", "arbitrary"),
        ),
        cost_estimate=pl.CostEstimate(
            flops=2 * bp * op * fp,
            transcendentals=0,
            bytes_accessed=bp * fp * 2 + op * fp * 2 + bp * op * 4 + op * 4,
        ),
    )(x2d, w_padded, b_padded)

    return out_padded[:b, :output_class]


if __name__ == "__main__":
    # Small shapes consistent with the module: input_shape = (B, C, H, W).
    B, C, H, W = 2, 4, 16, 16
    output_class = 10
    F = C * H * W

    key = jax.random.PRNGKey(0)
    kx, kw, kb = jax.random.split(key, 3)

    x = jax.random.normal(kx, (B, C, H, W), dtype=jnp.float32)

    # Deterministic nn.Linear-style init: U(-1/sqrt(F), 1/sqrt(F)).
    bound = 1.0 / (F ** 0.5)
    weight = jax.random.uniform(kw, (output_class, F), jnp.float32, -bound, bound)
    bias = jax.random.uniform(kb, (output_class,), jnp.float32, -bound, bound)

    # One-time parameter prep (pad + bf16 cast), then the jitted forward pass.
    w_p, b_p = prepare_params(weight, bias)
    fwd = jax.jit(output_layer_forward, static_argnums=(3,))
    out = jax.block_until_ready(fwd(x, w_p, b_p, output_class))
    assert out.shape == (B, output_class)

    # Tight check vs. a reference with matching bf16 operands / f32 accumulation.
    xb = x.reshape(B, F).astype(jnp.bfloat16)
    wb = weight.astype(jnp.bfloat16)
    ref_bf16 = jnp.maximum(
        jax.lax.dot_general(xb, wb, (((1,), (1,)), ((), ())),
                            preferred_element_type=jnp.float32) + bias, 0.0)
    assert jnp.allclose(out, ref_bf16, atol=1e-4, rtol=1e-4)

    # Loose check vs. the pure-f32 PyTorch-style reference (bf16 rounding only).
    ref_f32 = jnp.maximum(x.reshape(B, F) @ weight.T + bias, 0.0)
    assert jnp.allclose(out, ref_f32, atol=5e-2, rtol=5e-2)

    print("KERNEL_OK")
</pallas_src>

<mosaic_0001>
module attributes {stable_mosaic.version = 11 : i64} {
  func.func @_linear_relu_kernel(%arg0: i32, %arg1: i32, %arg2: i32, %arg3: memref<8x512xbf16, #tpu.memory_space<vmem>>, %arg4: memref<128x512xbf16, #tpu.memory_space<vmem>>, %arg5: memref<1x128xf32, #tpu.memory_space<vmem>>, %arg6: memref<8x128xf32, #tpu.memory_space<vmem>>, %arg7: memref<8x128xf32, #tpu.memory_space<vmem>>) attributes {dimension_semantics = [#tpu.dimension_semantics<parallel>, #tpu.dimension_semantics<parallel>, #tpu.dimension_semantics<arbitrary>], iteration_bounds = array<i64: 1, 1, 2>, scalar_prefetch = 0 : i64, scratch_operands = 1 : i64, tpu.core_type = #tpu.core_type<tc>, window_params = [{transform_indices = @transform_0, window_bounds = array<i64: 8, 512>}, {transform_indices = @transform_1, window_bounds = array<i64: 128, 512>}, {transform_indices = @transform_2, window_bounds = array<i64: 1, 128>}, {transform_indices = @transform_3, window_bounds = array<i64: 8, 128>}]} {
    %c0_i32 = arith.constant 0 : i32
    %0 = arith.cmpi eq, %arg2, %c0_i32 : i32
    %1 = arith.extui %0 : i1 to i32
    %c0_i32_0 = arith.constant 0 : i32
    %2 = arith.cmpi ne, %1, %c0_i32_0 : i32
    scf.if %2 {
      %cst_9 = arith.constant 0.000000e+00 : f32
      %12 = vector.broadcast %cst_9 : f32 to vector<8x128xf32>
      %c0_10 = arith.constant 0 : index
      %c0_11 = arith.constant 0 : index
      %13 = vector.load %arg7[%c0_10, %c0_11] : memref<8x128xf32, #tpu.memory_space<vmem>>, vector<8x128xf32>
      tpu.vector_store %arg7[%c0_10, %c0_11], %12 {strides = array<i32>} : memref<8x128xf32, #tpu.memory_space<vmem>>, vector<8x128xf32>,
    } else {
    }
    %c0 = arith.constant 0 : index
    %c0_1 = arith.constant 0 : index
    %3 = vector.load %arg7[%c0, %c0_1] : memref<8x128xf32, #tpu.memory_space<vmem>>, vector<8x128xf32>
    %c0_2 = arith.constant 0 : index
    %c0_3 = arith.constant 0 : index
    %4 = vector.load %arg3[%c0_2, %c0_3] : memref<8x512xbf16, #tpu.memory_space<vmem>>, vector<8x512xbf16>
    %c0_4 = arith.constant 0 : index
    %c0_5 = arith.constant 0 : index
    %5 = vector.load %arg4[%c0_4, %c0_5] : memref<128x512xbf16, #tpu.memory_space<vmem>>, vector<128x512xbf16>
    %cst = arith.constant dense<0.000000e+00> : vector<8x128xf32>
    %6 = tpu.matmul %4, %5, %cst {dimension_numbers = #tpu.dot_dimension_numbers<[1], [1], [0], [0], [0, 0, 1, 0], [], []>} : vector<8x512xbf16>, vector<128x512xbf16>, vector<8x128xf32> -> vector<8x128xf32>
    %7 = arith.addf %3, %6 : vector<8x128xf32>
    %c0_6 = arith.constant 0 : index
    %c0_7 = arith.constant 0 : index
    %8 = vector.load %arg7[%c0_6, %c0_7] : memref<8x128xf32, #tpu.memory_space<vmem>>, vector<8x128xf32>
    tpu.vector_store %arg7[%c0_6, %c0_7], %7 {strides = array<i32>} : memref<8x128xf32, #tpu.memory_space<vmem>>, vector<8x128xf32>,
    %c1_i32 = arith.constant 1 : i32
    %9 = arith.cmpi eq, %arg2, %c1_i32 : i32
    %10 = arith.extui %9 : i1 to i32
    %c0_i32_8 = arith.constant 0 : i32
    %11 = arith.cmpi ne, %10, %c0_i32_8 : i32
    scf.if %11 {
      %c0_9 = arith.constant 0 : index
      %c0_10 = arith.constant 0 : index
      %12 = vector.load %arg7[%c0_9, %c0_10] : memref<8x128xf32, #tpu.memory_space<vmem>>, vector<8x128xf32>
      %c0_11 = arith.constant 0 : index
      %c0_12 = arith.constant 0 : index
      %13 = vector.load %arg5[%c0_11, %c0_12] : memref<1x128xf32, #tpu.memory_space<vmem>>, vector<1x128xf32>
      %14 = vector.broadcast %13 : vector<1x128xf32> to vector<8x128xf32>
      %15 = arith.addf %12, %14 : vector<8x128xf32>
      %cst_13 = arith.constant 0.000000e+00 : f32
      %16 = vector.broadcast %cst_13 : f32 to vector<8x128xf32>
      %17 = arith.maximumf %15, %16 : vector<8x128xf32>
      %c0_14 = arith.constant 0 : index
      %c0_15 = arith.constant 0 : index
      %18 = vector.load %arg6[%c0_14, %c0_15] : memref<8x128xf32, #tpu.memory_space<vmem>>, vector<8x128xf32>
      tpu.vector_store %arg6[%c0_14, %c0_15], %17 {strides = array<i32>} : memref<8x128xf32, #tpu.memory_space<vmem>>, vector<8x128xf32>,
    } else {
    }
    return
  }
  func.func @transform_0(%arg0: i32, %arg1: i32, %arg2: i32) -> (i32, i32) {
    %c0_i32 = arith.constant 0 : i32
    return %arg0, %arg2 : i32, i32
  }
  func.func @transform_1(%arg0: i32, %arg1: i32, %arg2: i32) -> (i32, i32) {
    %c0_i32 = arith.constant 0 : i32
    return %arg1, %arg2 : i32, i32
  }
  func.func @transform_2(%arg0: i32, %arg1: i32, %arg2: i32) -> (i32, i32) {
    %c0_i32 = arith.constant 0 : i32
    %c0_i32_0 = arith.constant 0 : i32
    return %c0_i32, %arg1 : i32, i32
  }
  func.func @transform_3(%arg0: i32, %arg1: i32, %arg2: i32) -> (i32, i32) {
    %c0_i32 = arith.constant 0 : i32
    return %arg0, %arg1 : i32, i32
  }
}

</mosaic_0001>

<llo_original>
// kernel: output_layer_forward.1
$region0: #{output_layer_forward.1}
  #allocation0 [shape = 'u32[]', space=smem, size = 0x4, offset = 0x4, fixed_abs, tag = 'smem constant byte address 0x4 - core index']
  #allocation1 [shape = 'u32[144,128]{1,0:T(1,128)}', space=vmem, size = 0x12000, scoped, tag = 'internal scratch']
  #allocation2 [shape = 'f32[8,128]{1,0:T(8,128)}', space=vmem, size = 0x1000, scoped, tag = 'scratch operand']
  %s0 = inlined_call_operand.vmem [shape: bf16[8,1024], index: 0, kind: input, shape index: {}]
  %s1 = inlined_call_operand.hbm [shape: bf16[128,1024], index: 1, kind: input, shape index: {}]
  %s2 = inlined_call_operand.vmem [shape: f32[1,128], index: 2, kind: input, shape index: {}]
  %s3 = inlined_call_operand.vmem [shape: f32[8,128], index: 3, kind: output, shape index: {}]
  %s4 = sld [smem:[#allocation0]]
  $region57: #{output_layer_forward.1} parent=0
    _
  %s6 = ssub.s32 1, %s4
  %s7 = scalar_select 0, %s6, %s4
  $region1: #{output_layer_forward.1} parent=0
    #allocation3 [shape = 'u8[262144]{0}', space=vmem, size = 0x40000, scoped, tag = 'input window, operand 1']
    #allocation4 [shape = 's32[2]{0}', space=sflag, size = 0x8, scoped, tag = 'scoped memory for output_layer_forward.1']
    %8 = vsyncpa [#allocation4], 0
    %s9 = scalar_lea.sflag [#allocation4], 1
    %10 = vsyncpa %s9, 0
    loop: start=0, step=1, limit=4
    $region2: #{output_layer_forward.1} parent=1 // loop_pre_header
      _
    $region3: #{output_layer_forward.1} parent=1 // loop_header
      %s12 = sphi 0, %s16
      %p13 = scmp.ge.s32.totalorder %s12, 4
      %s19 = sphi 0, %s38
      %s20 = sphi 0, %s34
      %s21 = sphi 0, %s30
      %s22 = sphi 0, %s19
      %s23 = sphi 0, %s20
      %s24 = sphi 0, %s21
      %s25 = sphi 0, %s22
      %s26 = sphi 0, %s23
      %s27 = sphi 0, %s24
      %s43 = sphi 0, %s45
      %s46 = sphi 0, %s43
      %s47 = sphi 0, %s46
      %s63 = sphi 0, %s47
      %s71 = sphi 0, %s73
      %s74 = sphi 0, %s71
      %s75 = sphi 0, %s74
      %s91 = sphi 0, %s75
      %s97 = sphi 0, %s99
      %s100 = sphi 0, %s97
      %s101 = sphi 0, %s100
      %s117 = sphi 0, %s101
      %s125 = sphi 0, %s127
      %s128 = sphi 0, %s125
      %s129 = sphi 0, %s128
      %s145 = sphi 0, %s129
    $region4: #{output_layer_forward.1} parent=1 // loop_header_branch
      %15 = sbr.rel (%p13) target = $region8
    $region5: #{output_layer_forward.1} parent=1 // loop_body
      %s17 = ssub.s32 %s12, 1
      %s18 = ssub.s32 %s12, 2
      %s28 = sadd.s32 1, %s21
      %p29 = scmp.ge.s32.totalorder %s28, 2
      %s30 = scalar_select %p29, 0, %s28
      %s31 = sadd.s32 1, %s20
      %s32 = scalar_select %p29, %s31, %s20
      %p33 = scmp.ge.s32.totalorder %s32, 1
      %s34 = scalar_select %p33, 0, %s32
      %s35 = sadd.s32 1, %s19
      %s36 = scalar_select %p33, %s35, %s19
      %p37 = scmp.ge.s32.totalorder %s36, 1
      %s38 = scalar_select %p37, 0, %s36
      %s39 = ssub.s32 %s19, %s38
      %s40 = ssub.s32 %s21, %s30
      %s41 = sor.u32 %s39, %s40
      %p42 = scmp.eq.s32.totalorder %s41, 0
      %s44 = sadd.s32 %s43, 1
      %s45 = scalar_select %p42, %s43, %s44
      %p48 = pneg %p42
      %p49 = scmp.eq.s32.totalorder %s12, 1
      %p50 = por %p48, %p49
      %p51 = scmp.ne.s32.totalorder %s43, %s46
      %p52 = scmp.eq.s32.totalorder %s12, 0
      %p53 = por %p51, %p52
      %p54 = scmp.ne.s32.totalorder %s43, %s46
      %p55 = scmp.eq.s32.totalorder %s17, 1
      %p56 = por %p54, %p55
      %p57 = scmp.ne.s32.totalorder %s46, %s47
      %p58 = scmp.eq.s32.totalorder %s17, 0
      %p59 = por %p57, %p58
      %p60 = scmp.ne.s32.totalorder %s46, %s47
      %p61 = scmp.eq.s32.totalorder %s18, 1
      %p62 = por %p60, %p61
      %p64 = scmp.ne.s32.totalorder %s47, %s63
      %p65 = scmp.eq.s32.totalorder %s18, 0
      %p66 = por %p64, %p65
      %s67 = ssub.s32 %s20, %s34
      %s68 = ssub.s32 %s21, %s30
      %s69 = sor.u32 %s67, %s68
      %p70 = scmp.eq.s32.totalorder %s69, 0
      %s72 = sadd.s32 %s71, 1
      %s73 = scalar_select %p70, %s71, %s72
      %p76 = pneg %p70
      %p77 = scmp.eq.s32.totalorder %s12, 1
      %p78 = por %p76, %p77
      %p79 = scmp.ne.s32.totalorder %s71, %s74
      %p80 = scmp.eq.s32.totalorder %s12, 0
      %p81 = por %p79, %p80
      %p82 = scmp.ne.s32.totalorder %s71, %s74
      %p83 = scmp.eq.s32.totalorder %s17, 1
      %p84 = por %p82, %p83
      %p85 = scmp.ne.s32.totalorder %s74, %s75
      %p86 = scmp.eq.s32.totalorder %s17, 0
      %p87 = por %p85, %p86
      %p88 = scmp.ne.s32.totalorder %s74, %s75
      %p89 = scmp.eq.s32.totalorder %s18, 1
      %p90 = por %p88, %p89
      %p92 = scmp.ne.s32.totalorder %s75, %s91
      %p93 = scmp.eq.s32.totalorder %s18, 0
      %p94 = por %p92, %p93
      %s95 = ssub.s32 %s20, %s34
      %p96 = scmp.eq.s32.totalorder %s95, 0
      %s98 = sadd.s32 %s97, 1
      %s99 = scalar_select %p96, %s97, %s98
      %p102 = pneg %p96
      %p103 = scmp.eq.s32.totalorder %s12, 1
      %p104 = por %p102, %p103
      %p105 = scmp.ne.s32.totalorder %s97, %s100
      %p106 = scmp.eq.s32.totalorder %s12, 0
      %p107 = por %p105, %p106
      %p108 = scmp.ne.s32.totalorder %s97, %s100
      %p109 = scmp.eq.s32.totalorder %s17, 1
      %p110 = por %p108, %p109
      %p111 = scmp.ne.s32.totalorder %s100, %s101
      %p112 = scmp.eq.s32.totalorder %s17, 0
      %p113 = por %p111, %p112
      %p114 = scmp.ne.s32.totalorder %s100, %s101
      %p115 = scmp.eq.s32.totalorder %s18, 1
      %p116 = por %p114, %p115
      %p118 = scmp.ne.s32.totalorder %s101, %s117
      %p119 = scmp.eq.s32.totalorder %s18, 0
      %p120 = por %p118, %p119
      %s121 = ssub.s32 %s19, %s38
      %s122 = ssub.s32 %s20, %s34
      %s123 = sor.u32 %s121, %s122
      %p124 = scmp.eq.s32.totalorder %s123, 0
      %s126 = sadd.s32 %s125, 1
      %s127 = scalar_select %p124, %s125, %s126
      %p130 = pneg %p124
      %p131 = scmp.eq.s32.totalorder %s12, 1
      %p132 = por %p130, %p131
      %p133 = scmp.ne.s32.totalorder %s125, %s128
      %p134 = scmp.eq.s32.totalorder %s12, 0
      %p135 = por %p133, %p134
      %p136 = scmp.ne.s32.totalorder %s125, %s128
      %p137 = scmp.eq.s32.totalorder %s17, 1
      %p138 = por %p136, %p137
      %p139 = scmp.ne.s32.totalorder %s128, %s129
      %p140 = scmp.eq.s32.totalorder %s17, 0
      %p141 = por %p139, %p140
      %p142 = scmp.ne.s32.totalorder %s128, %s129
      %p143 = scmp.eq.s32.totalorder %s18, 1
      %p144 = por %p142, %p143
      %p146 = scmp.ne.s32.totalorder %s129, %s145
      %p147 = scmp.eq.s32.totalorder %s18, 0
      %p148 = por %p146, %p147
      %p149 = scmp.le.s32.totalorder 1, %s12
      %p150 = scmp.lt.s32.totalorder %s12, 3
      %p151 = pnand %p149, %p150
      %p152 = pneg %p151
      // Predicated region
      $region9: #{output_layer_forward.1} parent=5 // pred_check
        _
      $region10: #{output_layer_forward.1} parent=5 // pred_check_branch
        %154 = sbr.rel (%p151) target = $region12
      $region11: #{output_layer_forward.1} parent=5 // pred_region
        %s155 = ssub.s32 %s12, 1
        // Predicated region
        $region13: #{output_layer_forward.1} parent=11 // pred_check
          %p156 = pneg %p113
        $region14: #{output_layer_forward.1} parent=11 // pred_check_branch
          %158 = sbr.rel (%p156) target = $region16
        $region15: #{output_layer_forward.1} parent=11 // pred_region
          %p159 = scmp.lt.s32.totalorder %s23, 0
          %s160 = scalar_select %p159, %s23, 0
          %s161 = scalar_lea.vmem %s2, %s160
        $region16: #{output_layer_forward.1} parent=11 // pred_fallthru
          _
      $region12: #{output_layer_forward.1} parent=5 // pred_fallthru
        _
      %p162 = scmp.lt.s32.totalorder %s12, 2
      // Predicated region
      $region17: #{output_layer_forward.1} parent=5 // pred_check
        %p163 = pneg %p162
      $region18: #{output_layer_forward.1} parent=5 // pred_check_branch
        %165 = sbr.rel (%p163) target = $region20
      $region19: #{output_layer_forward.1} parent=5 // pred_region
        // Predicated region
        $region21: #{output_layer_forward.1} parent=19 // pred_check
          %p166 = pneg %p53
        $region22: #{output_layer_forward.1} parent=19 // pred_check_branch
          %168 = sbr.rel (%p166) target = $region24
        $region23: #{output_layer_forward.1} parent=19 // pred_region
          %s169 = smul.u32 4, %s21
          %p170 = scmp.lt.s32.totalorder %s19, 0
          %s171 = scalar_select %p170, %s19, 0
          %p172 = scmp.lt.s32.totalorder %s169, 7
          %s173 = scalar_select %p172, %s169, 7
          %s174 = smul.addr %s171, 8
          %s175 = sadd.s32 %s173, %s174
          %s176 = smul.addr %s175, 4
          %s177 = scalar_lea.vmem %s0, %s176
          %s178 = smul.u32 4, %s21
        $region24: #{output_layer_forward.1} parent=19 // pred_fallthru
          _
        // Predicated region
        $region25: #{output_layer_forward.1} parent=19 // pred_check
          %p179 = pneg %p81
        $region26: #{output_layer_forward.1} parent=19 // pred_check_branch
          %181 = sbr.rel (%p179) target = $region28
        $region27: #{output_layer_forward.1} parent=19 // pred_region
          %s182 = sand.u32 %s71, 1
          %s183 = scalar_lea.sflag [#allocation4], %s182
          %s184 = sand.u32 %s71, 1
          %s185 = smul.addr %s184, 256
          %s186 = scalar_lea.vmem [#allocation3], %s185
          %s187 = smul.u32 16, %s20
          %s188 = smul.u32 4, %s21
          %s190 = ssub.s32 4096, 4096
          %191 = vsyncadd %s183, %s190
          %s192 = smul.addr %s187, 8
          %s193 = sadd.s32 %s188, %s192
          %s194 = smul.addr %s193, 64
          %s195 = scalar_lea.hbm %s1, %s194
          %s196 = sshll.u32 %s186, 4
          %s197 = int_to_ptr.vmem [resolvable:$true] %s196
          %202 = dma.hbm_to_vmem [thread:$0]  %s195, 4096, %s197, %s183, 512, 256, 16
        $region28: #{output_layer_forward.1} parent=19 // pred_fallthru
          _
      $region20: #{output_layer_forward.1} parent=5 // pred_fallthru
        _
      %p203 = scmp.le.s32.totalorder 1, %s12
      %p204 = scmp.lt.s32.totalorder %s12, 3
      %p205 = pnand %p203, %p204
      %p206 = pneg %p205
      // Predicated region
      $region29: #{output_layer_forward.1} parent=5 // pred_check
        _
      $region30: #{output_layer_forward.1} parent=5 // pred_check_branch
        %208 = sbr.rel (%p205) target = $region32
      $region31: #{output_layer_forward.1} parent=5 // pred_region
        %s209 = ssub.s32 %s12, 1
        %s210 = sand.u32 %s74, 1
        %s211 = scalar_lea.sflag [#allocation4], %s210
        %s212 = sand.u32 %s74, 1
        %s213 = smul.addr %s212, 256
        %s214 = scalar_lea.vmem [#allocation3], %s213
        // Predicated region
        $region33: #{output_layer_forward.1} parent=31 // pred_check
          %p215 = pneg %p87
        $region34: #{output_layer_forward.1} parent=31 // pred_check_branch
          %217 = sbr.rel (%p215) target = $region36
        $region35: #{output_layer_forward.1} parent=31 // pred_region
          %218 = dma.done %s211, 4096
        $region36: #{output_layer_forward.1} parent=31 // pred_fallthru
          _
        %s219 = smul.u32 4, %s24
        %p220 = scmp.lt.s32.totalorder %s22, 0
        %s221 = scalar_select %p220, %s22, 0
        %p222 = scmp.lt.s32.totalorder %s219, 7
        %s223 = scalar_select %p222, %s219, 7
        %s224 = smul.addr %s221, 8
        %s225 = sadd.s32 %s223, %s224
        %s226 = smul.addr %s225, 4
        %s227 = scalar_lea.vmem %s0, %s226
        %p228 = pneg %p59
        %p229 = pneg %p56
        %s230 = sand.u32 %s74, 1
        %s231 = scalar_lea.sflag [#allocation4], %s230
        %s232 = sand.u32 %s74, 1
        %s233 = smul.addr %s232, 256
        %s234 = scalar_lea.vmem [#allocation3], %s233
        %p235 = pneg %p87
        %p236 = pneg %p84
        %p237 = scmp.lt.s32.totalorder %s23, 0
        %s238 = scalar_select %p237, %s23, 0
        %s239 = scalar_lea.vmem %s2, %s238
        %p240 = pneg %p113
        %p241 = pneg %p110
        %p242 = pneg %p141
        %p243 = pneg %p138
        %p244 = scmp.lt.s32.totalorder %s22, 0
        %s245 = scalar_select %p244, %s22, 0
        %p246 = scmp.lt.s32.totalorder %s23, 0
        %s247 = scalar_select %p246, %s23, 0
        %s248 = sadd.s32 %s247, %s245
        %s249 = smul.addr %s248, 8
        %s250 = scalar_lea.vmem %s3, %s249
        %s251 = smul.u32 4, %s24
        %p252 = scmp.lt.s32.totalorder %s22, 0
        %s253 = scalar_select %p252, %s22, 0
        %p254 = scmp.lt.s32.totalorder %s251, 7
        %s255 = scalar_select %p254, %s251, 7
        %s256 = smul.addr %s253, 8
        %s257 = sadd.s32 %s255, %s256
        %s258 = smul.addr %s257, 4
        %s259 = scalar_lea.vmem %s0, %s258
        %s260 = smul.u32 4, %s24
        %s261 = smul.u32 16, %s23
        %s262 = smul.u32 4, %s24
        %p263 = scmp.lt.s32.totalorder %s23, 0
        %s264 = scalar_select %p263, %s23, 0
        %s265 = scalar_lea.vmem %s2, %s264
        %p266 = scmp.lt.s32.totalorder %s22, 0
        %s267 = scalar_select %p266, %s22, 0
        %p268 = scmp.lt.s32.totalorder %s23, 0
        %s269 = scalar_select %p268, %s23, 0
        %s270 = sadd.s32 %s269, %s267
        %s271 = smul.addr %s270, 8
        %s272 = scalar_lea.vmem %s3, %s271
        %p274 = scmp.eq.s32.totalorder %s24, 0
        // Predicated region
        $region37: #{output_layer_forward.1} parent=31 // pred_check
          %p275 = pneg %p274
        $region38: #{output_layer_forward.1} parent=31 // pred_check_branch
          %277 = sbr.rel (%p275) target = $region40
        $region39: #{output_layer_forward.1} parent=31 // pred_region
          %278 = vst [vmem:[#allocation2] sm:$0xff] 0.0
        $region40: #{output_layer_forward.1} parent=31 // pred_fallthru
          _
        %v279 = vld [vmem:[#allocation2] sm:$0xff]
        %v280 = vld [vmem:[%s259] sm:$0xff]
        %v281 = vld [vmem:[%s259 + $0x8] sm:$0xff]
        %v282 = vld [vmem:[%s214] sm:$0xff]
        %v283 = vld [vmem:[%s214 + $0x8] sm:$0xff]
        %v284 = vld [vmem:[%s214 + $0x10] sm:$0xff]
        %v285 = vld [vmem:[%s214 + $0x18] sm:$0xff]
        %v286 = vld [vmem:[%s214 + $0x20] sm:$0xff]
        %v287 = vld [vmem:[%s214 + $0x28] sm:$0xff]
        %v288 = vld [vmem:[%s214 + $0x30] sm:$0xff]
        %v289 = vld [vmem:[%s214 + $0x38] sm:$0xff]
        %v290 = vld [vmem:[%s214 + $0x40] sm:$0xff]
        %v291 = vld [vmem:[%s214 + $0x48] sm:$0xff]
        %v292 = vld [vmem:[%s214 + $0x50] sm:$0xff]
        %v293 = vld [vmem:[%s214 + $0x58] sm:$0xff]
        %v294 = vld [vmem:[%s214 + $0x60] sm:$0xff]
        %v295 = vld [vmem:[%s214 + $0x68] sm:$0xff]
        %v296 = vld [vmem:[%s214 + $0x70] sm:$0xff]
        %v297 = vld [vmem:[%s214 + $0x78] sm:$0xff]
        %v298 = vld [vmem:[%s214 + $0x80] sm:$0xff]
        %v299 = vld [vmem:[%s214 + $0x88] sm:$0xff]
        %v300 = vld [vmem:[%s214 + $0x90] sm:$0xff]
        %v301 = vld [vmem:[%s214 + $0x98] sm:$0xff]
        %v302 = vld [vmem:[%s214 + $0xa0] sm:$0xff]
        %v303 = vld [vmem:[%s214 + $0xa8] sm:$0xff]
        %v304 = vld [vmem:[%s214 + $0xb0] sm:$0xff]
        %v305 = vld [vmem:[%s214 + $0xb8] sm:$0xff]
        %v306 = vld [vmem:[%s214 + $0xc0] sm:$0xff]
        %v307 = vld [vmem:[%s214 + $0xc8] sm:$0xff]
        %v308 = vld [vmem:[%s214 + $0xd0] sm:$0xff]
        %v309 = vld [vmem:[%s214 + $0xd8] sm:$0xff]
        %v310 = vld [vmem:[%s214 + $0xe0] sm:$0xff]
        %v311 = vld [vmem:[%s214 + $0xe8] sm:$0xff]
        %v312 = vld [vmem:[%s214 + $0xf0] sm:$0xff]
        %v313 = vld [vmem:[%s214 + $0xf8] sm:$0xff]
        %v316 = vunpack.c.l.b16 %v280
        %v317 = vunpack.c.h.b16 %v280
        %v318 = vunpack.c.l.b16 %v281
        %v319 = vunpack.c.h.b16 %v281
        %v320 = vpack.c.b16 %v316, %v316
        %v321 = vpack.c.b16 %v317, %v317
        %v322 = vpack.c.b16 %v318, %v318
        %v323 = vpack.c.b16 %v319, %v319
        %v360 = vunpack.c.l.b16 %v282
        %v361 = vunpack.c.h.b16 %v282
        %v362 = vunpack.c.l.b16 %v283
        %v363 = vunpack.c.h.b16 %v283
        %v364 = vunpack.c.l.b16 %v284
        %v365 = vunpack.c.h.b16 %v284
        %v366 = vunpack.c.l.b16 %v285
        %v367 = vunpack.c.h.b16 %v285
        %v368 = vunpack.c.l.b16 %v286
        %v369 = vunpack.c.h.b16 %v286
        %v370 = vunpack.c.l.b16 %v287
        %v371 = vunpack.c.h.b16 %v287
        %v372 = vunpack.c.l.b16 %v288
        %v373 = vunpack.c.h.b16 %v288
        %v374 = vunpack.c.l.b16 %v289
        %v375 = vunpack.c.h.b16 %v289
        %v376 = vunpack.c.l.b16 %v290
        %v377 = vunpack.c.h.b16 %v290
        %v378 = vunpack.c.l.b16 %v291
        %v379 = vunpack.c.h.b16 %v291
        %v380 = vunpack.c.l.b16 %v292
        %v381 = vunpack.c.h.b16 %v292
        %v382 = vunpack.c.l.b16 %v293
        %v383 = vunpack.c.h.b16 %v293
        %v384 = vunpack.c.l.b16 %v294
        %v385 = vunpack.c.h.b16 %v294
        %v386 = vunpack.c.l.b16 %v295
        %v387 = vunpack.c.h.b16 %v295
        %v388 = vunpack.c.l.b16 %v296
        %v389 = vunpack.c.h.b16 %v296
        %v390 = vunpack.c.l.b16 %v297
        %v391 = vunpack.c.h.b16 %v297
        %v392 = vunpack.c.l.b16 %v298
        %v393 = vunpack.c.h.b16 %v298
        %v394 = vunpack.c.l.b16 %v299
        %v395 = vunpack.c.h.b16 %v299
        %v396 = vunpack.c.l.b16 %v300
        %v397 = vunpack.c.h.b16 %v300
        %v398 = vunpack.c.l.b16 %v301
        %v399 = vunpack.c.h.b16 %v301
        %v400 = vunpack.c.l.b16 %v302
        %v401 = vunpack.c.h.b16 %v302
        %v402 = vunpack.c.l.b16 %v303
        %v403 = vunpack.c.h.b16 %v303
        %v404 = vunpack.c.l.b16 %v304
        %v405 = vunpack.c.h.b16 %v304
        %v406 = vunpack.c.l.b16 %v305
        %v407 = vunpack.c.h.b16 %v305
        %v408 = vunpack.c.l.b16 %v306
        %v409 = vunpack.c.h.b16 %v306
        %v410 = vunpack.c.l.b16 %v307
        %v411 = vunpack.c.h.b16 %v307
        %v412 = vunpack.c.l.b16 %v308
        %v413 = vunpack.c.h.b16 %v308
        %v414 = vunpack.c.l.b16 %v309
        %v415 = vunpack.c.h.b16 %v309
        %v416 = vunpack.c.l.b16 %v310
        %v417 = vunpack.c.h.b16 %v310
        %v418 = vunpack.c.l.b16 %v311
        %v419 = vunpack.c.h.b16 %v311
        %v420 = vunpack.c.l.b16 %v312
        %v421 = vunpack.c.h.b16 %v312
        %v422 = vunpack.c.l.b16 %v313
        %v423 = vunpack.c.h.b16 %v313
        %v424 = vpack.c.b16 %v364, %v360
        %v425 = vpack.c.b16 %v365, %v361
        %v426 = vpack.c.b16 %v366, %v362
        %v427 = vpack.c.b16 %v367, %v363
        %v428 = vpack.c.b16 %v372, %v368
        %v429 = vpack.c.b16 %v373, %v369
        %v430 = vpack.c.b16 %v374, %v370
        %v431 = vpack.c.b16 %v375, %v371
        %v432 = vpack.c.b16 %v380, %v376
        %v433 = vpack.c.b16 %v381, %v377
        %v434 = vpack.c.b16 %v382, %v378
        %v435 = vpack.c.b16 %v383, %v379
        %v436 = vpack.c.b16 %v388, %v384
        %v437 = vpack.c.b16 %v389, %v385
        %v438 = vpack.c.b16 %v390, %v386
        %v439 = vpack.c.b16 %v391, %v387
        %v440 = vpack.c.b16 %v396, %v392
        %v441 = vpack.c.b16 %v397, %v393
        %v442 = vpack.c.b16 %v398, %v394
        %v443 = vpack.c.b16 %v399, %v395
        %v444 = vpack.c.b16 %v404, %v400
        %v445 = vpack.c.b16 %v405, %v401
        %v446 = vpack.c.b16 %v406, %v402
        %v447 = vpack.c.b16 %v407, %v403
        %v448 = vpack.c.b16 %v412, %v408
        %v449 = vpack.c.b16 %v413, %v409
        %v450 = vpack.c.b16 %v414, %v410
        %v451 = vpack.c.b16 %v415, %v411
        %v452 = vpack.c.b16 %v420, %v416
        %v453 = vpack.c.b16 %v421, %v417
        %v454 = vpack.c.b16 %v422, %v418
        %v455 = vpack.c.b16 %v423, %v419
        %488 = vmatprep.subr.bf16.mxu0 %v425
        %489 = vmatpush1.bf16.xpose.msra.mxu0 %v424
        %490 = vmatprep.subr.bf16.mxu0 %v429
        %491 = vmatpush1.bf16.xpose.msra.mxu0 %v428
        %492 = vmatprep.subr.bf16.mxu0 %v433
        %493 = vmatpush1.bf16.xpose.msra.mxu0 %v432
        %494 = vmatprep.subr.bf16.mxu0 %v437
        %495 = vmatpush1.bf16.xpose.msra.mxu0 %v436
        %496 = vmatprep.subr.bf16.mxu0 %v441
        %497 = vmatpush1.bf16.xpose.msra.mxu0 %v440
        %498 = vmatprep.subr.bf16.mxu0 %v445
        %499 = vmatpush1.bf16.xpose.msra.mxu0 %v444
        %500 = vmatprep.subr.bf16.mxu0 %v449
        %501 = vmatpush1.bf16.xpose.msra.mxu0 %v448
        %502 = vmatprep.subr.bf16.mxu0 %v453
        %503 = vmatpush1.bf16.xpose.msra.mxu0 %v452
        %504 = vmatprep.subr.bf16.mxu0 0
        %505 = vmatpush1.bf16.xpose.msra.mxu0 0
        %506 = vmatprep.subr.bf16.mxu0 0
        %507 = vmatpush1.bf16.xpose.msra.mxu0 0
        %508 = vmatprep.subr.bf16.mxu0 0
        %509 = vmatpush1.bf16.xpose.msra.mxu0 0
        %510 = vmatprep.subr.bf16.mxu0 0
        %511 = vmatpush1.bf16.xpose.msra.mxu0 0
        %512 = vmatprep.subr.bf16.mxu0 0
        %513 = vmatpush1.bf16.xpose.msra.mxu0 0
        %514 = vmatprep.subr.bf16.mxu0 0
        %515 = vmatpush1.bf16.xpose.msra.mxu0 0
        %516 = vmatprep.subr.bf16.mxu0 0
        %517 = vmatpush1.bf16.xpose.msra.mxu0 0
        %518 = vmatprep.subr.bf16.mxu0 0
        %519 = vmatpush1.bf16.xpose.msra.mxu0 0
        %520 = vmatprep.mubr.bf16.mxu0 %v321
        %521 = vmatmul.mubr.bf16.gmra.mrb[0].mxu0 %v320
        %v522 = vpop.f32.mrb[0].mxu0
        %v523 = vadd.f32 0.0, %v522
        %v524 = vpop.f32.mrb[0].mxu0
        %v525 = vpop.f32.mrb[0].mxu0
        %v526 = vpop.f32.mrb[0].mxu0
        %527 = vdwg.mxu0
        %528 = vmatprep.subr.bf16.mxu0 %v427
        %529 = vmatpush1.bf16.xpose.msra.mxu0 %v426
        %530 = vmatprep.subr.bf16.mxu0 %v431
        %531 = vmatpush1.bf16.xpose.msra.mxu0 %v430
        %532 = vmatprep.subr.bf16.mxu0 %v435
        %533 = vmatpush1.bf16.xpose.msra.mxu0 %v434
        %534 = vmatprep.subr.bf16.mxu0 %v439
        %535 = vmatpush1.bf16.xpose.msra.mxu0 %v438
        %536 = vmatprep.subr.bf16.mxu0 %v443
        %537 = vmatpush1.bf16.xpose.msra.mxu0 %v442
        %538 = vmatprep.subr.bf16.mxu0 %v447
        %539 = vmatpush1.bf16.xpose.msra.mxu0 %v446
        %540 = vmatprep.subr.bf16.mxu0 %v451
        %541 = vmatpush1.bf16.xpose.msra.mxu0 %v450
        %542 = vmatprep.subr.bf16.mxu0 %v455
        %543 = vmatpush1.bf16.xpose.msra.mxu0 %v454
        %544 = vmatprep.subr.bf16.mxu0 0
        %545 = vmatpush1.bf16.xpose.msra.mxu0 0
        %546 = vmatprep.subr.bf16.mxu0 0
        %547 = vmatpush1.bf16.xpose.msra.mxu0 0
        %548 = vmatprep.subr.bf16.mxu0 0
        %549 = vmatpush1.bf16.xpose.msra.mxu0 0
        %550 = vmatprep.subr.bf16.mxu0 0
        %551 = vmatpush1.bf16.xpose.msra.mxu0 0
        %552 = vmatprep.subr.bf16.mxu0 0
        %553 = vmatpush1.bf16.xpose.msra.mxu0 0
        %554 = vmatprep.subr.bf16.mxu0 0
        %555 = vmatpush1.bf16.xpose.msra.mxu0 0
        %556 = vmatprep.subr.bf16.mxu0 0
        %557 = vmatpush1.bf16.xpose.msra.mxu0 0
        %558 = vmatprep.subr.bf16.mxu0 0
        %559 = vmatpush1.bf16.xpose.msra.mxu0 0
        %560 = vmatprep.mubr.bf16.mxu0 %v323
        %561 = vmatmul.mubr.bf16.gmra.mrb[0].mxu0 %v322
        %v562 = vpop.f32.mrb[0].mxu0
        %v563 = vadd.f32 %v523, %v562
        %v564 = vpop.f32.mrb[0].mxu0
        %v565 = vpop.f32.mrb[0].mxu0
        %v566 = vpop.f32.mrb[0].mxu0
        %567 = vdwg.mxu0
        %v568 = vadd.f32 %v279, %v563
        %569 = vst [vmem:[#allocation2] sm:$0xff] %v568
        %p570 = scmp.eq.s32.totalorder %s24, 1
        // Predicated region
        $region41: #{output_layer_forward.1} parent=31 // pred_check
          %p571 = pneg %p570
        $region42: #{output_layer_forward.1} parent=31 // pred_check_branch
          %573 = sbr.rel (%p571) target = $region44
        $region43: #{output_layer_forward.1} parent=31 // pred_region
          %v574 = vld [vmem:[#allocation2] sm:$0xff]
          %v575 = vld [vmem:[%s265] sm:$0x1]
          %v577 = vlaneseq
          %v578 = vshrl.u32 %v577, 7
          %v579 = vsub.s32 0, %v578
          %v580 = vrot.slane %v575, %v579
          %v582 = vadd.f32 %v574, %v580
          %v583 = vmax.f32 %v582, 0.0
          %584 = vst [vmem:[%s272] sm:$0xff] %v583
        $region44: #{output_layer_forward.1} parent=31 // pred_fallthru
          _
        %p585 = scmp.lt.s32.totalorder %s22, 0
        %s586 = scalar_select %p585, %s22, 0
        %p587 = scmp.lt.s32.totalorder %s23, 0
        %s588 = scalar_select %p587, %s23, 0
        %s589 = sadd.s32 %s588, %s586
        %s590 = smul.addr %s589, 8
        %s591 = scalar_lea.vmem %s3, %s590
        // Predicated region
        $region45: #{output_layer_forward.1} parent=31 // pred_check
          %p592 = pneg %p138
        $region46: #{output_layer_forward.1} parent=31 // pred_check_branch
          %594 = sbr.rel (%p592) target = $region48
        $region47: #{output_layer_forward.1} parent=31 // pred_region
          _
        $region48: #{output_layer_forward.1} parent=31 // pred_fallthru
          _
        // Predicated region
        $region49: #{output_layer_forward.1} parent=31 // pred_check
          %p595 = pneg %p138
        $region50: #{output_layer_forward.1} parent=31 // pred_check_branch
          %597 = sbr.rel (%p595) target = $region52
        $region51: #{output_layer_forward.1} parent=31 // pred_region
          %p598 = scmp.lt.s32.totalorder %s22, 0
          %s599 = scalar_select %p598, %s22, 0
          %p600 = scmp.lt.s32.totalorder %s23, 0
          %s601 = scalar_select %p600, %s23, 0
          %s602 = sadd.s32 %s601, %s599
          %s603 = smul.addr %s602, 8
          %s604 = scalar_lea.vmem %s3, %s603
        $region52: #{output_layer_forward.1} parent=31 // pred_fallthru
          _
      $region32: #{output_layer_forward.1} parent=5 // pred_fallthru
        _
      %p605 = scmp.le.s32.totalorder 2, %s12
      // Predicated region
      $region53: #{output_layer_forward.1} parent=5 // pred_check
        %p606 = pneg %p605
      $region54: #{output_layer_forward.1} parent=5 // pred_check_branch
        %608 = sbr.rel (%p606) target = $region56
      $region55: #{output_layer_forward.1} parent=5 // pred_region
        %s609 = ssub.s32 %s12, 2
      $region56: #{output_layer_forward.1} parent=5 // pred_fallthru
        _
    $region6: #{output_layer_forward.1} parent=1 // loop_footer
      %s16 = sadd.s32 1, %s12
    $region7: #{output_layer_forward.1} parent=1 // loop_footer_branch
      %11 = sbr.rel target = $region3
    $region8: #{output_layer_forward.1} parent=1 // loop_exit
      _
    %610 = vsyncpa [#allocation4], 1
    %s611 = scalar_lea.sflag [#allocation4], 1
    %612 = vsyncpa %s611, 1

</llo_original>
